<compile_context>
chip_gen: v7x
topology: tpu7x:2x2x1
jax: 0.10.0
libtpu: 0.0.40
codegen_flags: <defaults>
</compile_context>

<pallas_src>
import functools

import jax
import jax.numpy as jnp
from jax.experimental import pallas as pl
from jax.experimental.pallas import tpu as pltpu


def _fciou_kernel(pred_ref, ann_ref, acc_ref, *, eps, hw, tile_hw, needs_mask):
    # pred_ref : (1, C, T) logits for one batch element / one spatial tile
    # ann_ref  : (1, 1, T) int32 class indices for the same tile
    # acc_ref  : (1, C, 3) f32 accumulator, resident across the spatial grid axis
    #            lane 0: sum(p*onehot), lane 1: sum(p*p), lane 2: sum(onehot)
    j = pl.program_id(1)

    @pl.when(j == 0)
    def _():
        acc_ref[...] = jnp.zeros_like(acc_ref)

    x = pred_ref[0].astype(jnp.float32)                 # (C, T) widen on load
    c = x.shape[0]
    a = ann_ref[0]                                      # (1, T) int32

    # softmax over the channel (sublane) axis, matching torch.softmax(dim=1)
    m = jnp.max(x, axis=0, keepdims=True)               # (1, T)
    e = jnp.exp(x - m)                                  # (C, T)
    s = jnp.sum(e, axis=0, keepdims=True)               # (1, T)
    inv = 1.0 / s                                       # single-row exact divide
    p = e * inv + eps                                   # (C, T)

    # one-hot of the annotation along the channel axis
    class_ids = jax.lax.broadcasted_iota(jnp.int32, (c, 1), 0)   # (C, 1)
    hit = a == class_ids                                # (C, T) bool

    if needs_mask:
        # mask lanes beyond the true spatial extent of the last (partial) tile
        lane = jax.lax.broadcasted_iota(jnp.int32, (1, tile_hw), 1) + j * tile_hw
        valid = lane < hw                               # (1, T)
        hit = jnp.logical_and(hit, valid)
        p = jnp.where(valid, p, 0.0)

    onehot = hit.astype(jnp.float32)                    # (C, T)

    num_r = jnp.sum(p * onehot, axis=1, keepdims=True)  # (C, 1)
    p2_r = jnp.sum(p * p, axis=1, keepdims=True)        # (C, 1)
    cnt_r = jnp.sum(onehot, axis=1, keepdims=True)      # (C, 1)

    acc_ref[:, :, 0:1] += num_r[None]
    acc_ref[:, :, 1:2] += p2_r[None]
    acc_ref[:, :, 2:3] += cnt_r[None]


def _default_tile_hw(hw, c, pred_itemsize):
    """Spatial tile size keeping double-buffered inputs ~<= 6 MiB of VMEM
    (safe against the smallest scoped-VMEM defaults: v5e 16 MiB, v7x 32/64 MiB)."""
    # sublane padding of the (8,128) tiling: pred C rounds up to 8 (f32) / 16 (bf16),
    # the single-row int32 ann block still occupies 8 sublanes.
    sub = 8 if pred_itemsize >= 4 else 16
    c_pad = -(-c // sub) * sub
    bytes_per_lane = c_pad * pred_itemsize + 8 * 4      # pred block + ann block
    budget = 6 * 1024 * 1024
    t = budget // (2 * bytes_per_lane)                  # x2 for double buffering
    t = max(512, min(int(t), 16384))
    t = (t // 128) * 128                                # lane-aligned
    return hw if hw <= t else t


def fciou_v4(pred, ann, eps=1e-10, tile_hw=None):
    """pred: (B, C, H, W) float logits, ann: (B, H, W) integer labels -> (B,) loss."""
    b, c, h, w = pred.shape
    hw = h * w

    # DMA pred in its native dtype (no wrapper up-cast pass over HBM).
    if pred.dtype not in (jnp.float32, jnp.bfloat16, jnp.float16):
        pred = pred.astype(jnp.float32)
    pred_r = pred.reshape(b, c, hw)
    ann_i = ann.astype(jnp.int32).reshape(b, 1, hw)

    if tile_hw is None:
        tile_hw = _default_tile_hw(hw, c, pred_r.dtype.itemsize)
    tile_hw = min(tile_hw, hw)
    num_tiles = pl.cdiv(hw, tile_hw)
    needs_mask = (hw % tile_hw) != 0

    acc = pl.pallas_call(
        functools.partial(
            _fciou_kernel, eps=eps, hw=hw, tile_hw=tile_hw, needs_mask=needs_mask
        ),
        out_shape=jax.ShapeDtypeStruct((b, c, 3), jnp.float32),
        grid_spec=pltpu.PrefetchScalarGridSpec(
            num_scalar_prefetch=0,
            grid=(b, num_tiles),
            in_specs=[
                pl.BlockSpec((1, c, tile_hw), lambda i, j: (i, 0, j)),
                pl.BlockSpec((1, 1, tile_hw), lambda i, j: (i, 0, j)),
            ],
            out_specs=pl.BlockSpec((1, c, 3), lambda i, j: (i, 0, 0)),
        ),
        compiler_params=pltpu.CompilerParams(
            dimension_semantics=("parallel", "arbitrary")
        ),
    )(pred_r, ann_i)

    num_s = acc[:, :, 0]                                 # (B, C) sum((p+eps)*onehot)
    p2_s = acc[:, :, 1]                                  # (B, C) sum((p+eps)^2)
    cnt = acc[:, :, 2]                                   # (B, C) sum(onehot)

    denom = p2_s + cnt - num_s
    loss_iou = num_s / denom
    loss_iou = -jnp.log10(jnp.sqrt(10.0 * loss_iou + eps) + eps) + 0.51

    # Reproduce the PyTorch quirk: classes absent from the *entire* ann tensor
    # only zero the entry of batch row 0.
    present_any = jnp.sum(cnt, axis=0) > 0.0             # (C,)
    loss_iou = loss_iou.at[0].set(jnp.where(present_any, loss_iou[0], 0.0))

    return jnp.sum(loss_iou, axis=1)                     # (B,)


def _reference(pred, ann, eps=1e-10):
    """Pure-JAX reference mirroring the PyTorch forward, for verification."""
    b, c, h, w = pred.shape
    p = jax.nn.softmax(pred.astype(jnp.float32), axis=1) + eps
    onehot = jax.nn.one_hot(ann.astype(jnp.int32), c, axis=1, dtype=jnp.float32)
    num = p * onehot
    denom = p * p + onehot - num
    num = jnp.sum(num, axis=(2, 3))
    denom = jnp.sum(denom, axis=(2, 3))
    loss = num / denom
    loss = -jnp.log10(jnp.sqrt(10.0 * loss + eps) + eps) + 0.51
    present = jnp.array([jnp.any(ann == ci) for ci in range(c)])
    loss = loss.at[0].set(jnp.where(present, loss[0], 0.0))
    return jnp.sum(loss, axis=1)


if __name__ == "__main__":
    key = jax.random.PRNGKey(0)
    kp, ka, kp2, ka2 = jax.random.split(key, 4)

    # Case 1: small shape consistent with the module (single whole-HW tile).
    B, C, H, W = 2, 4, 16, 16
    pred = jax.random.normal(kp, (B, C, H, W), dtype=jnp.float32)
    # labels drawn from [0, C-1) so at least one class is absent (exercises zeroing)
    ann = jax.random.randint(ka, (B, H, W), minval=0, maxval=C - 1, dtype=jnp.int32)

    out = jax.block_until_ready(fciou_v4(pred, ann))
    ref = jax.block_until_ready(_reference(pred, ann))
    assert out.shape == (B,)
    assert jnp.allclose(out, ref, atol=1e-4, rtol=1e-4), (out, ref)

    # Case 2: exercises the tiled/accumulating + masked-partial-tile path
    # (HW=1600, tile=512 -> 4 tiles, last tile only 64 valid lanes).
    B2, C2, H2, W2 = 2, 5, 40, 40
    pred2 = jax.random.normal(kp2, (B2, C2, H2, W2), dtype=jnp.float32)
    ann2 = jax.random.randint(ka2, (B2, H2, W2), minval=0, maxval=C2 - 1,
                              dtype=jnp.int32)

    out2 = jax.block_until_ready(fciou_v4(pred2, ann2, tile_hw=512))
    ref2 = jax.block_until_ready(_reference(pred2, ann2))
    assert out2.shape == (B2,)
    assert jnp.allclose(out2, ref2, atol=1e-4, rtol=1e-4), (out2, ref2)

    print("KERNEL_OK")
</pallas_src>

<mosaic_0001>
module attributes {stable_mosaic.version = 11 : i64} {
  func.func @_fciou_kernel(%arg0: i32, %arg1: i32, %arg2: memref<1x4x256xf32, #tpu.memory_space<vmem>>, %arg3: memref<1x1x256xi32, #tpu.memory_space<vmem>>, %arg4: memref<1x4x3xf32, #tpu.memory_space<vmem>>) attributes {dimension_semantics = [#tpu.dimension_semantics<parallel>, #tpu.dimension_semantics<arbitrary>], iteration_bounds = array<i64: 2, 1>, scalar_prefetch = 0 : i64, scratch_operands = 0 : i64, tpu.core_type = #tpu.core_type<tc>, window_params = [{transform_indices = @transform_0, window_bounds = array<i64: 1, 4, 256>}, {transform_indices = @transform_1, window_bounds = array<i64: 1, 1, 256>}, {transform_indices = @transform_2, window_bounds = array<i64: 1, 4, 3>}]} {
    %c0_i32 = arith.constant 0 : i32
    %0 = arith.cmpi eq, %arg1, %c0_i32 : i32
    %1 = arith.extui %0 : i1 to i32
    %c0_i32_0 = arith.constant 0 : i32
    %2 = arith.cmpi ne, %1, %c0_i32_0 : i32
    scf.if %2 {
      %cst_28 = arith.constant 0.000000e+00 : f32
      %46 = vector.broadcast %cst_28 : f32 to vector<1x4x3xf32>
      %c0_29 = arith.constant 0 : index
      %c0_30 = arith.constant 0 : index
      %c0_31 = arith.constant 0 : index
      %47 = vector.load %arg4[%c0_29, %c0_30, %c0_31] : memref<1x4x3xf32, #tpu.memory_space<vmem>>, vector<1x4x3xf32>
      tpu.vector_store %arg4[%c0_29, %c0_30, %c0_31], %46 {strides = array<i32>} : memref<1x4x3xf32, #tpu.memory_space<vmem>>, vector<1x4x3xf32>,
    } else {
    }
    %c0 = arith.constant 0 : index
    %c0_1 = arith.constant 0 : index
    %c0_2 = arith.constant 0 : index
    %3 = vector.load %arg2[%c0, %c0_1, %c0_2] : memref<1x4x256xf32, #tpu.memory_space<vmem>>, vector<1x4x256xf32>
    %4 = vector.shape_cast %3 : vector<1x4x256xf32> to vector<4x256xf32>
    %c0_3 = arith.constant 0 : index
    %c0_4 = arith.constant 0 : index
    %c0_5 = arith.constant 0 : index
    %5 = vector.load %arg3[%c0_3, %c0_4, %c0_5] : memref<1x1x256xi32, #tpu.memory_space<vmem>>, vector<1x1x256xi32>
    %6 = vector.shape_cast %5 : vector<1x1x256xi32> to vector<1x256xi32>
    %cst = arith.constant dense<0xFF800000> : vector<256xf32>
    %7 = vector.multi_reduction <maximumf>, %4, %cst [0] : vector<4x256xf32> to vector<256xf32>
    %8 = vector.shape_cast %7 : vector<256xf32> to vector<1x256xf32>
    %9 = vector.broadcast %8 : vector<1x256xf32> to vector<4x256xf32>
    %10 = arith.subf %4, %9 : vector<4x256xf32>
    %11 = math.exp %10 : vector<4x256xf32>
    %cst_6 = arith.constant dense<0.000000e+00> : vector<256xf32>
    %12 = vector.multi_reduction <add>, %11, %cst_6 [0] : vector<4x256xf32> to vector<256xf32>
    %13 = vector.shape_cast %12 : vector<256xf32> to vector<1x256xf32>
    %cst_7 = arith.constant 1.000000e+00 : f32
    %14 = vector.broadcast %cst_7 : f32 to vector<1x256xf32>
    %15 = arith.divf %14, %13 : vector<1x256xf32>
    %16 = vector.broadcast %15 : vector<1x256xf32> to vector<4x256xf32>
    %17 = arith.mulf %11, %16 : vector<4x256xf32>
    %cst_8 = arith.constant 1.000000e-10 : f32
    %18 = vector.broadcast %cst_8 : f32 to vector<4x256xf32>
    %19 = arith.addf %17, %18 : vector<4x256xf32>
    %20 = tpu.iota {dimensions = array<i32: 0>} : vector<4x1xi32>
    %21 = vector.broadcast %6 : vector<1x256xi32> to vector<4x256xi32>
    %22 = vector.broadcast %20 : vector<4x1xi32> to vector<4x256xi32>
    %23 = arith.cmpi eq, %21, %22 : vector<4x256xi32>
    %24 = arith.extui %23 : vector<4x256xi1> to vector<4x256xi32>
    %25 = arith.sitofp %24 : vector<4x256xi32> to vector<4x256xf32>
    %26 = arith.mulf %19, %25 : vector<4x256xf32>
    %cst_9 = arith.constant dense<0.000000e+00> : vector<4xf32>
    %27 = vector.multi_reduction <add>, %26, %cst_9 [1] : vector<4x256xf32> to vector<4xf32>
    %28 = vector.shape_cast %27 : vector<4xf32> to vector<4x1xf32>
    %29 = arith.mulf %19, %19 : vector<4x256xf32>
    %cst_10 = arith.constant dense<0.000000e+00> : vector<4xf32>
    %30 = vector.multi_reduction <add>, %29, %cst_10 [1] : vector<4x256xf32> to vector<4xf32>
    %31 = vector.shape_cast %30 : vector<4xf32> to vector<4x1xf32>
    %cst_11 = arith.constant dense<0.000000e+00> : vector<4xf32>
    %32 = vector.multi_reduction <add>, %25, %cst_11 [1] : vector<4x256xf32> to vector<4xf32>
    %33 = vector.shape_cast %32 : vector<4xf32> to vector<4x1xf32>
    %c0_12 = arith.constant 0 : index
    %c0_13 = arith.constant 0 : index
    %c0_14 = arith.constant 0 : index
    %34 = vector.load %arg4[%c0_12, %c0_13, %c0_14] : memref<1x4x3xf32, #tpu.memory_space<vmem>>, vector<1x4x1xf32>
    %35 = vector.shape_cast %28 : vector<4x1xf32> to vector<1x4x1xf32>
    %36 = arith.addf %34, %35 : vector<1x4x1xf32>
    %c0_15 = arith.constant 0 : index
    %c0_16 = arith.constant 0 : index
    %c0_17 = arith.constant 0 : index
    %37 = vector.load %arg4[%c0_15, %c0_16, %c0_17] : memref<1x4x3xf32, #tpu.memory_space<vmem>>, vector<1x4x1xf32>
    tpu.vector_store %arg4[%c0_15, %c0_16, %c0_17], %36 {strides = array<i32>} : memref<1x4x3xf32, #tpu.memory_space<vmem>>, vector<1x4x1xf32>,
    %c0_18 = arith.constant 0 : index
    %c0_19 = arith.constant 0 : index
    %c1 = arith.constant 1 : index
    %38 = vector.load %arg4[%c0_18, %c0_19, %c1] : memref<1x4x3xf32, #tpu.memory_space<vmem>>, vector<1x4x1xf32>
    %39 = vector.shape_cast %31 : vector<4x1xf32> to vector<1x4x1xf32>
    %40 = arith.addf %38, %39 : vector<1x4x1xf32>
    %c0_20 = arith.constant 0 : index
    %c0_21 = arith.constant 0 : index
    %c1_22 = arith.constant 1 : index
    %41 = vector.load %arg4[%c0_20, %c0_21, %c1_22] : memref<1x4x3xf32, #tpu.memory_space<vmem>>, vector<1x4x1xf32>
    tpu.vector_store %arg4[%c0_20, %c0_21, %c1_22], %40 {strides = array<i32>} : memref<1x4x3xf32, #tpu.memory_space<vmem>>, vector<1x4x1xf32>,
    %c0_23 = arith.constant 0 : index
    %c0_24 = arith.constant 0 : index
    %c2 = arith.constant 2 : index
    %42 = vector.load %arg4[%c0_23, %c0_24, %c2] : memref<1x4x3xf32, #tpu.memory_space<vmem>>, vector<1x4x1xf32>
    %43 = vector.shape_cast %33 : vector<4x1xf32> to vector<1x4x1xf32>
    %44 = arith.addf %42, %43 : vector<1x4x1xf32>
    %c0_25 = arith.constant 0 : index
    %c0_26 = arith.constant 0 : index
    %c2_27 = arith.constant 2 : index
    %45 = vector.load %arg4[%c0_25, %c0_26, %c2_27] : memref<1x4x3xf32, #tpu.memory_space<vmem>>, vector<1x4x1xf32>
    tpu.vector_store %arg4[%c0_25, %c0_26, %c2_27], %44 {strides = array<i32>} : memref<1x4x3xf32, #tpu.memory_space<vmem>>, vector<1x4x1xf32>,
    return
  }
  func.func @transform_0(%arg0: i32, %arg1: i32) -> (i32, i32, i32) {
    %c0_i32 = arith.constant 0 : i32
    %c0_i32_0 = arith.constant 0 : i32
    return %arg0, %c0_i32, %arg1 : i32, i32, i32
  }
  func.func @transform_1(%arg0: i32, %arg1: i32) -> (i32, i32, i32) {
    %c0_i32 = arith.constant 0 : i32
    %c0_i32_0 = arith.constant 0 : i32
    return %arg0, %c0_i32, %arg1 : i32, i32, i32
  }
  func.func @transform_2(%arg0: i32, %arg1: i32) -> (i32, i32, i32) {
    %c0_i32 = arith.constant 0 : i32
    %c0_i32_0 = arith.constant 0 : i32
    %c0_i32_1 = arith.constant 0 : i32
    return %arg0, %c0_i32, %c0_i32_0 : i32, i32, i32
  }
}

</mosaic_0001>

<llo_original>
// kernel: tpu_custom_call.1
$region0: #{tpu_custom_call.1}
  #allocation0 [shape = 'u32[]', space=smem, size = 0x4, offset = 0x4, fixed_abs, tag = 'smem constant byte address 0x4 - core index']
  #allocation1 [shape = 'u32[144,128]{1,0:T(1,128)}', space=vmem, size = 0x12000, scoped, tag = 'internal scratch']
  %s0 = inlined_call_operand.hbm [shape: f32[2,4,256], index: 0, kind: input, shape index: {}]
  %s1 = inlined_call_operand.hbm [shape: s32[2,1,256], index: 1, kind: input, shape index: {}]
  %s2 = inlined_call_operand.vmem [shape: f32[2,4,3], index: 2, kind: output, shape index: {}]
  %s3 = sld [smem:[#allocation0]]
  $region53: #{tpu_custom_call.1} parent=0
    _
  %s5 = ssub.s32 1, %s3
  %s6 = scalar_select 0, %s5, %s3
  $region1: #{tpu_custom_call.1} parent=0
    #allocation2 [shape = 'u8[8192]{0}', space=vmem, size = 0x2000, scoped, tag = 'input window, operand 0']
    #allocation3 [shape = 's32[2]{0}', space=sflag, size = 0x8, scoped, tag = 'scoped memory for tpu_custom_call.1']
    #allocation4 [shape = 'u8[2048]{0}', space=vmem, size = 0x800, scoped, tag = 'input window, operand 1']
    #allocation5 [shape = 's32[2]{0}', space=sflag, size = 0x8, scoped, tag = 'scoped memory for tpu_custom_call.1']
    %7 = vsyncpa [#allocation3], 0
    %s8 = scalar_lea.sflag [#allocation3], 1
    %9 = vsyncpa %s8, 0
    %10 = vsyncpa [#allocation5], 0
    %s11 = scalar_lea.sflag [#allocation5], 1
    %12 = vsyncpa %s11, 0
    loop: start=0, step=1, limit=4
    $region2: #{tpu_custom_call.1} parent=1 // loop_pre_header
      _
    $region3: #{tpu_custom_call.1} parent=1 // loop_header
      %s14 = sphi 0, %s18
      %p15 = scmp.ge.s32.totalorder %s14, 4
      %s21 = sphi 0, %s33
      %s22 = sphi 0, %s29
      %s23 = sphi 0, %s21
      %s24 = sphi 0, %s22
      %s25 = sphi 0, %s23
      %s26 = sphi 0, %s24
      %s38 = sphi 0, %s40
      %s41 = sphi 0, %s38
      %s42 = sphi 0, %s41
      %s58 = sphi 0, %s42
      %s66 = sphi 0, %s68
      %s69 = sphi 0, %s66
      %s70 = sphi 0, %s69
      %s86 = sphi 0, %s70
      %s92 = sphi 0, %s94
      %s95 = sphi 0, %s92
      %s96 = sphi 0, %s95
      %s112 = sphi 0, %s96
    $region4: #{tpu_custom_call.1} parent=1 // loop_header_branch
      %17 = sbr.rel (%p15) target = $region8
    $region5: #{tpu_custom_call.1} parent=1 // loop_body
      %s19 = ssub.s32 %s14, 1
      %s20 = ssub.s32 %s14, 2
      %s27 = sadd.s32 1, %s22
      %p28 = scmp.ge.s32.totalorder %s27, 1
      %s29 = scalar_select %p28, 0, %s27
      %s30 = sadd.s32 1, %s21
      %s31 = scalar_select %p28, %s30, %s21
      %p32 = scmp.ge.s32.totalorder %s31, 2
      %s33 = scalar_select %p32, 0, %s31
      %s34 = ssub.s32 %s21, %s33
      %s35 = ssub.s32 %s22, %s29
      %s36 = sor.u32 %s34, %s35
      %p37 = scmp.eq.s32.totalorder %s36, 0
      %s39 = sadd.s32 %s38, 1
      %s40 = scalar_select %p37, %s38, %s39
      %p43 = pneg %p37
      %p44 = scmp.eq.s32.totalorder %s14, 1
      %p45 = por %p43, %p44
      %p46 = scmp.ne.s32.totalorder %s38, %s41
      %p47 = scmp.eq.s32.totalorder %s14, 0
      %p48 = por %p46, %p47
      %p49 = scmp.ne.s32.totalorder %s38, %s41
      %p50 = scmp.eq.s32.totalorder %s19, 1
      %p51 = por %p49, %p50
      %p52 = scmp.ne.s32.totalorder %s41, %s42
      %p53 = scmp.eq.s32.totalorder %s19, 0
      %p54 = por %p52, %p53
      %p55 = scmp.ne.s32.totalorder %s41, %s42
      %p56 = scmp.eq.s32.totalorder %s20, 1
      %p57 = por %p55, %p56
      %p59 = scmp.ne.s32.totalorder %s42, %s58
      %p60 = scmp.eq.s32.totalorder %s20, 0
      %p61 = por %p59, %p60
      %s62 = ssub.s32 %s21, %s33
      %s63 = ssub.s32 %s22, %s29
      %s64 = sor.u32 %s62, %s63
      %p65 = scmp.eq.s32.totalorder %s64, 0
      %s67 = sadd.s32 %s66, 1
      %s68 = scalar_select %p65, %s66, %s67
      %p71 = pneg %p65
      %p72 = scmp.eq.s32.totalorder %s14, 1
      %p73 = por %p71, %p72
      %p74 = scmp.ne.s32.totalorder %s66, %s69
      %p75 = scmp.eq.s32.totalorder %s14, 0
      %p76 = por %p74, %p75
      %p77 = scmp.ne.s32.totalorder %s66, %s69
      %p78 = scmp.eq.s32.totalorder %s19, 1
      %p79 = por %p77, %p78
      %p80 = scmp.ne.s32.totalorder %s69, %s70
      %p81 = scmp.eq.s32.totalorder %s19, 0
      %p82 = por %p80, %p81
      %p83 = scmp.ne.s32.totalorder %s69, %s70
      %p84 = scmp.eq.s32.totalorder %s20, 1
      %p85 = por %p83, %p84
      %p87 = scmp.ne.s32.totalorder %s70, %s86
      %p88 = scmp.eq.s32.totalorder %s20, 0
      %p89 = por %p87, %p88
      %s90 = ssub.s32 %s21, %s33
      %p91 = scmp.eq.s32.totalorder %s90, 0
      %s93 = sadd.s32 %s92, 1
      %s94 = scalar_select %p91, %s92, %s93
      %p97 = pneg %p91
      %p98 = scmp.eq.s32.totalorder %s14, 1
      %p99 = por %p97, %p98
      %p100 = scmp.ne.s32.totalorder %s92, %s95
      %p101 = scmp.eq.s32.totalorder %s14, 0
      %p102 = por %p100, %p101
      %p103 = scmp.ne.s32.totalorder %s92, %s95
      %p104 = scmp.eq.s32.totalorder %s19, 1
      %p105 = por %p103, %p104
      %p106 = scmp.ne.s32.totalorder %s95, %s96
      %p107 = scmp.eq.s32.totalorder %s19, 0
      %p108 = por %p106, %p107
      %p109 = scmp.ne.s32.totalorder %s95, %s96
      %p110 = scmp.eq.s32.totalorder %s20, 1
      %p111 = por %p109, %p110
      %p113 = scmp.ne.s32.totalorder %s96, %s112
      %p114 = scmp.eq.s32.totalorder %s20, 0
      %p115 = por %p113, %p114
      %p116 = scmp.le.s32.totalorder 1, %s14
      %p117 = scmp.lt.s32.totalorder %s14, 3
      %p118 = pnand %p116, %p117
      %p119 = pneg %p118
      // Predicated region
      $region9: #{tpu_custom_call.1} parent=5 // pred_check
        _
      $region10: #{tpu_custom_call.1} parent=5 // pred_check_branch
        %121 = sbr.rel (%p118) target = $region12
      $region11: #{tpu_custom_call.1} parent=5 // pred_region
        %s122 = ssub.s32 %s14, 1
      $region12: #{tpu_custom_call.1} parent=5 // pred_fallthru
        _
      %p123 = scmp.lt.s32.totalorder %s14, 2
      // Predicated region
      $region13: #{tpu_custom_call.1} parent=5 // pred_check
        %p124 = pneg %p123
      $region14: #{tpu_custom_call.1} parent=5 // pred_check_branch
        %126 = sbr.rel (%p124) target = $region16
      $region15: #{tpu_custom_call.1} parent=5 // pred_region
        // Predicated region
        $region17: #{tpu_custom_call.1} parent=15 // pred_check
          %p127 = pneg %p48
        $region18: #{tpu_custom_call.1} parent=15 // pred_check_branch
          %129 = sbr.rel (%p127) target = $region20
        $region19: #{tpu_custom_call.1} parent=15 // pred_region
          %s130 = sand.u32 %s38, 1
          %s131 = scalar_lea.sflag [#allocation3], %s130
          %s132 = sand.u32 %s38, 1
          %s133 = smul.addr %s132, 8
          %s134 = scalar_lea.vmem [#allocation2], %s133
          %s135 = smul.u32 2, %s22
          %s137 = ssub.s32 128, 128
          %138 = vsyncadd %s131, %s137
          %s139 = smul.addr %s21, 2
          %s140 = sadd.s32 %s135, %s139
          %s141 = smul.addr %s140, 64
          %s142 = scalar_lea.hbm %s0, %s141
          %s144 = sshll.u32 %s134, 4
          %s145 = int_to_ptr.vmem [resolvable:$true] %s144
          %147 = dma.hbm_to_vmem [thread:$0]  %s142, 128, %s145, %s131
        $region20: #{tpu_custom_call.1} parent=15 // pred_fallthru
          _
        // Predicated region
        $region21: #{tpu_custom_call.1} parent=15 // pred_check
          %p148 = pneg %p76
        $region22: #{tpu_custom_call.1} parent=15 // pred_check_branch
          %150 = sbr.rel (%p148) target = $region24
        $region23: #{tpu_custom_call.1} parent=15 // pred_region
          %s151 = sand.u32 %s66, 1
          %s152 = scalar_lea.sflag [#allocation5], %s151
          %s153 = sand.u32 %s66, 1
          %s154 = smul.addr %s153, 2
          %s155 = scalar_lea.vmem [#allocation4], %s154
          %s156 = smul.u32 2, %s22
          %s158 = ssub.s32 32, 32
          %159 = vsyncadd %s152, %s158
          %s160 = smul.addr %s21, 2
          %s161 = sadd.s32 %s156, %s160
          %s162 = smul.addr %s161, 16
          %s163 = scalar_lea.hbm %s1, %s162
          %s165 = sshll.u32 %s155, 4
          %s166 = int_to_ptr.vmem [resolvable:$true] %s165
          %168 = dma.hbm_to_vmem [thread:$0]  %s163, 32, %s166, %s152
        $region24: #{tpu_custom_call.1} parent=15 // pred_fallthru
          _
      $region16: #{tpu_custom_call.1} parent=5 // pred_fallthru
        _
      %p169 = scmp.le.s32.totalorder 1, %s14
      %p170 = scmp.lt.s32.totalorder %s14, 3
      %p171 = pnand %p169, %p170
      %p172 = pneg %p171
      // Predicated region
      $region25: #{tpu_custom_call.1} parent=5 // pred_check
        _
      $region26: #{tpu_custom_call.1} parent=5 // pred_check_branch
        %174 = sbr.rel (%p171) target = $region28
      $region27: #{tpu_custom_call.1} parent=5 // pred_region
        %s175 = ssub.s32 %s14, 1
        %s176 = sand.u32 %s41, 1
        %s177 = scalar_lea.sflag [#allocation3], %s176
        %s178 = sand.u32 %s41, 1
        %s179 = smul.addr %s178, 8
        %s180 = scalar_lea.vmem [#allocation2], %s179
        // Predicated region
        $region29: #{tpu_custom_call.1} parent=27 // pred_check
          %p181 = pneg %p54
        $region30: #{tpu_custom_call.1} parent=27 // pred_check_branch
          %183 = sbr.rel (%p181) target = $region32
        $region31: #{tpu_custom_call.1} parent=27 // pred_region
          %184 = dma.done %s177, 128
        $region32: #{tpu_custom_call.1} parent=27 // pred_fallthru
          _
        %s185 = sand.u32 %s69, 1
        %s186 = scalar_lea.sflag [#allocation5], %s185
        %s187 = sand.u32 %s69, 1
        %s188 = smul.addr %s187, 2
        %s189 = scalar_lea.vmem [#allocation4], %s188
        // Predicated region
        $region33: #{tpu_custom_call.1} parent=27 // pred_check
          %p190 = pneg %p82
        $region34: #{tpu_custom_call.1} parent=27 // pred_check_branch
          %192 = sbr.rel (%p190) target = $region36
        $region35: #{tpu_custom_call.1} parent=27 // pred_region
          %193 = dma.done %s186, 32
        $region36: #{tpu_custom_call.1} parent=27 // pred_fallthru
          _
        %s194 = sand.u32 %s41, 1
        %s195 = scalar_lea.sflag [#allocation3], %s194
        %s196 = sand.u32 %s41, 1
        %s197 = smul.addr %s196, 8
        %s198 = scalar_lea.vmem [#allocation2], %s197
        %p199 = pneg %p54
        %p200 = pneg %p51
        %s201 = sand.u32 %s69, 1
        %s202 = scalar_lea.sflag [#allocation5], %s201
        %s203 = sand.u32 %s69, 1
        %s204 = smul.addr %s203, 2
        %s205 = scalar_lea.vmem [#allocation4], %s204
        %p206 = pneg %p82
        %p207 = pneg %p79
        %p208 = pneg %p108
        %p209 = pneg %p105
        %p210 = scmp.lt.s32.totalorder %s23, 1
        %s211 = scalar_select %p210, %s23, 1
        %s212 = smul.addr %s211, 4
        %s213 = scalar_lea.vmem %s2, %s212
        %s214 = smul.u32 2, %s24
        %s215 = smul.u32 2, %s24
        %p216 = scmp.lt.s32.totalorder %s23, 1
        %s217 = scalar_select %p216, %s23, 1
        %s218 = smul.addr %s217, 4
        %s219 = scalar_lea.vmem %s2, %s218
        %p220 = scmp.eq.s32.totalorder %s24, 0
        // Predicated region
        $region37: #{tpu_custom_call.1} parent=27 // pred_check
          %p221 = pneg %p220
        $region38: #{tpu_custom_call.1} parent=27 // pred_check_branch
          %223 = sbr.rel (%p221) target = $region40
        $region39: #{tpu_custom_call.1} parent=27 // pred_region
          %vm224 = vcmask 19456
          %225 = vst.msk [vmem:[%s219] sm:$0xf] %vm224, 0.0
        $region40: #{tpu_custom_call.1} parent=27 // pred_fallthru
          _
        %v226 = vld [vmem:[%s180] sm:$0xff]
        %v227 = vld [vmem:[%s189] sm:$0x3]
        %v229 = vcombine.high %v226, %v226
        %vm231 = vcmask 1043456
        %v232 = vsel %vm231, %v226, -inf
        %v233 = vrot.slane %v232, 4
        %v234 = vmax.f32 %v232, %v233
        %v235 = vrot.slane %v234, 2
        %v236 = vmax.f32 %v234, %v235
        %v237 = vrot.slane %v236, 1
        %v238 = vmax.f32 %v236, %v237
        %v239 = vsel %vm231, %v229, -inf
        %v240 = vrot.slane %v239, 4
        %v241 = vmax.f32 %v239, %v240
        %v242 = vrot.slane %v241, 2
        %v243 = vmax.f32 %v241, %v242
        %v244 = vrot.slane %v243, 1
        %v245 = vmax.f32 %v243, %v244
        %v248 = vcombine.low %v238, %v245
        %v250 = vsub.f32 %v226, %v248
        %v251 = vmul.f32 %v250, 1.442695
        %v252 = vpow.pop %v251
        %v254 = vcombine.high %v252, %v252
        %v256 = vsel %vm231, %v252, 0.0
        %v257 = vrot.slane %v256, 4
        %v258 = vadd.f32 %v256, %v257
        %v259 = vrot.slane %v258, 2
        %v260 = vadd.f32 %v258, %v259
        %v261 = vrot.slane %v260, 1
        %v262 = vadd.f32 %v260, %v261
        %v263 = vsel %vm231, %v254, 0.0
        %v264 = vrot.slane %v263, 4
        %v265 = vadd.f32 %v263, %v264
        %v266 = vrot.slane %v265, 2
        %v267 = vadd.f32 %v265, %v266
        %v268 = vrot.slane %v267, 1
        %v269 = vadd.f32 %v267, %v268
        %v270 = vrcp.pop %v262
        %v271 = vmul.f32 1.0, %v270
        %v272 = vrcp.pop %v269
        %v273 = vmul.f32 1.0, %v272
        %v276 = vcombine.low %v271, %v273
        %v278 = vmul.f32 %v252, %v276
        %v279 = vadd.f32 %v278, 1e-10
        %v280 = vlaneseq
        %v281 = vshrl.u32 %v280, 7
        %v282 = vlaneseq
        %v283 = vshrl.u32 %v282, 7
        %v284 = vsub.s32 0, %v283
        %v285 = vrot.slane %v227, %v284
        %v286 = vlaneseq
        %v287 = vshrl.u32 %v286, 7
        %v288 = vsub.s32 1, %v287
        %v289 = vrot.slane %v227, %v288
        %vm290 = vcmp.eq.s32.totalorder %v285, %v281
        %vm291 = vcmp.eq.s32.totalorder %v289, %v281
        %v292 = vsel %vm290, 1, 0
        %v293 = vsel %vm291, 1, 0
        %v294 = vcvt.s32.f32 %v292
        %v295 = vcvt.s32.f32 %v293
        %v298 = vcombine.low %v294, %v295
        %v300 = vmul.f32 %v279, %v298
        %v302 = vcombine.high %v300, %v300
        %v304 = vsel %vm231, %v300, 0.0
        %v305 = vsel %vm231, %v302, 0.0
        %v306 = vadd.f32 %v304, %v305
        %307 = vadd.xlane.f32.xlu0 %v306
        %v308 = vpop.xlane.xlu0 %307
        %v309 = vmul.f32 %v279, %v279
        %v311 = vcombine.high %v309, %v309
        %v313 = vsel %vm231, %v309, 0.0
        %v314 = vsel %vm231, %v311, 0.0
        %v315 = vadd.f32 %v313, %v314
        %316 = vadd.xlane.f32.xlu0 %v315
        %v317 = vpop.xlane.xlu0 %316
        %v318 = vsel %vm231, %v294, 0.0
        %v319 = vsel %vm231, %v295, 0.0
        %v320 = vadd.f32 %v318, %v319
        %321 = vadd.xlane.f32.xlu0 %v320
        %v322 = vpop.xlane.xlu0 %321
        %v323 = vld [vmem:[%s219] sm:$0xf]
        %v324 = vadd.f32 %v323, %v308
        %vm325 = vcmask 3072
        %326 = vst.msk [vmem:[%s219] sm:$0xf] %vm325, %v324
        %v327 = vld [vmem:[%s219] sm:$0xf]
        %v328 = vadd.f32 %v327, %v317
        %vm329 = vcmask 11272
        %330 = vst.msk [vmem:[%s219] sm:$0xf] %vm329, %v328
        %v331 = vld [vmem:[%s219] sm:$0xf]
        %v332 = vadd.f32 %v331, %v322
        %vm333 = vcmask 19472
        %334 = vst.msk [vmem:[%s219] sm:$0xf] %vm333, %v332
        %p335 = scmp.lt.s32.totalorder %s23, 1
        %s336 = scalar_select %p335, %s23, 1
        %s337 = smul.addr %s336, 4
        %s338 = scalar_lea.vmem %s2, %s337
        // Predicated region
        $region41: #{tpu_custom_call.1} parent=27 // pred_check
          %p339 = pneg %p105
        $region42: #{tpu_custom_call.1} parent=27 // pred_check_branch
          %341 = sbr.rel (%p339) target = $region44
        $region43: #{tpu_custom_call.1} parent=27 // pred_region
          _
        $region44: #{tpu_custom_call.1} parent=27 // pred_fallthru
          _
      $region28: #{tpu_custom_call.1} parent=5 // pred_fallthru
        _
      %p342 = scmp.le.s32.totalorder 2, %s14
      // Predicated region
      $region45: #{tpu_custom_call.1} parent=5 // pred_check
        %p343 = pneg %p342
      $region46: #{tpu_custom_call.1} parent=5 // pred_check_branch
        %345 = sbr.rel (%p343) target = $region48
      $region47: #{tpu_custom_call.1} parent=5 // pred_region
        %s346 = ssub.s32 %s14, 2
        // Predicated region
        $region49: #{tpu_custom_call.1} parent=47 // pred_check
          %p347 = pneg %p111
        $region50: #{tpu_custom_call.1} parent=47 // pred_check_branch
          %349 = sbr.rel (%p347) target = $region52
        $region51: #{tpu_custom_call.1} parent=47 // pred_region
          %p350 = scmp.lt.s32.totalorder %s25, 1
          %s351 = scalar_select %p350, %s25, 1
          %s352 = smul.addr %s351, 4
          %s353 = scalar_lea.vmem %s2, %s352
        $region52: #{tpu_custom_call.1} parent=47 // pred_fallthru
          _
      $region48: #{tpu_custom_call.1} parent=5 // pred_fallthru
        _
    $region6: #{tpu_custom_call.1} parent=1 // loop_footer
      %s18 = sadd.s32 1, %s14
    $region7: #{tpu_custom_call.1} parent=1 // loop_footer_branch
      %13 = sbr.rel target = $region3
    $region8: #{tpu_custom_call.1} parent=1 // loop_exit
      _
    %354 = vsyncpa [#allocation3], 1
    %s355 = scalar_lea.sflag [#allocation3], 1
    %356 = vsyncpa %s355, 1
    %357 = vsyncpa [#allocation5], 1
    %s358 = scalar_lea.sflag [#allocation5], 1
    %359 = vsyncpa %s358, 1

</llo_original>
